<compile_context>
chip_gen: v5e
topology: v5e:2x2
jax: 0.10.0
libtpu: 0.0.40
codegen_flags: <defaults>
</compile_context>

<pallas_src>
import math
import functools

import jax
import jax.numpy as jnp
from jax.experimental import pallas as pl
from jax.experimental.pallas import tpu as pltpu

NEG_SLOPE = 0.2
ACT_SCALE = math.sqrt(2.0)


def _round_up(a, b):
    return (a + b - 1) // b * b


def _default_compute_dtype():
    """bf16 elementwise chain on chips with bf16 VPUs (v6e/v7x); f32 otherwise (v5e)."""
    try:
        kind = jax.devices()[0].device_kind.lower()
    except Exception:
        return jnp.float32
    if ("v6" in kind) or ("v7" in kind) or ("7x" in kind):
        return jnp.bfloat16
    return jnp.float32


# ---------------------------------------------------------------------------
# One-time probe: does this jax/Mosaic accept pipeline_mode=pl.Buffered(1) on a
# grid-invariant BlockSpec of a top-level pallas_call (and produce correct data)?
# ---------------------------------------------------------------------------
_BUFFERED1_SUPPORTED = None


def _single_buffer_spec_supported():
    global _BUFFERED1_SUPPORTED
    if _BUFFERED1_SUPPORTED is not None:
        return _BUFFERED1_SUPPORTED

    def probe_kernel(a_ref, c_ref, o_ref):
        o_ref[...] = a_ref[...] + c_ref[...]

    try:
        const_spec = pl.BlockSpec((8, 128), lambda i: (0, 0),
                                  pipeline_mode=pl.Buffered(1))
        out = pl.pallas_call(
            probe_kernel,
            out_shape=jax.ShapeDtypeStruct((16, 128), jnp.float32),
            grid=(2,),
            in_specs=[pl.BlockSpec((8, 128), lambda i: (i, 0)), const_spec],
            out_specs=pl.BlockSpec((8, 128), lambda i: (i, 0)),
        )(jnp.zeros((16, 128), jnp.float32), jnp.ones((8, 128), jnp.float32))
        out = jax.block_until_ready(out)
        _BUFFERED1_SUPPORTED = bool(jnp.all(out == 1.0))
    except Exception:
        _BUFFERED1_SUPPORTED = False
    return _BUFFERED1_SUPPORTED


# ---------------------------------------------------------------------------
# Kernel
# ---------------------------------------------------------------------------
def _mapping_kernel(x_ref, w_ref, b_ref, o_ref, *, n_layers, compute_dtype):
    """One (tm, dim) row tile through PixelNorm + n_layers EqualLinear(fused_lrelu).

    w_ref: (L, in_dim, out_dim) bf16 with scale*sqrt(2) pre-folded.
    b_ref: (L, out_dim)        f32 with lr_mul*sqrt(2) pre-folded.
    """
    x = x_ref[...].astype(jnp.float32)

    # ---- PixelNorm: x * rsqrt(mean(x^2, feature) + 1e-8) -- keep in f32 ----
    # (zero padding rows hit rsqrt(0 + 1e-8): finite, sliced off in the wrapper)
    ms = jnp.mean(x * x, axis=1, keepdims=True)
    x = x * jax.lax.rsqrt(ms + 1e-8)
    x = x.astype(compute_dtype)

    # Static unrolled loop over the small, fixed number of MLP layers.
    for l in range(n_layers):
        # MXU: bf16 operands, f32 accumulation.
        y = jnp.dot(x.astype(jnp.bfloat16), w_ref[l],
                    preferred_element_type=jnp.float32)
        # Elementwise chain in compute_dtype (bf16 on v6e/v7x, f32 on v5e).
        y = y.astype(compute_dtype) + b_ref[l].astype(compute_dtype)
        # fused_leaky_relu; sqrt(2) gain already folded into W_l / b_l
        # (leaky_relu is positively homogeneous: scale*leaky(y) == leaky(scale*y)).
        # TODO(synk): fused_leaky_relu_v (v=False, last layer) is not defined in
        #             the reference source; assumed identical to fused_leaky_relu.
        x = jnp.where(y >= 0, y, NEG_SLOPE * y)

    o_ref[...] = x.astype(o_ref.dtype)


# ---------------------------------------------------------------------------
# Host-side param folding (do ONCE at init, not per forward call)
# ---------------------------------------------------------------------------
def prepare_mapping_params(weights, biases, *, lr_mul=0.01):
    """Fold all constant scales into the parameters.

    weights: (L, out_dim, in_dim) raw PyTorch-layout EqualLinear weights
             (randn / lr_mul, as stored by the module).
    biases:  (L, out_dim) raw.
    Returns (w_eff, b_eff):
      w_eff: (L, in_dim, out_dim) bf16, scale * sqrt(2) folded in,
      b_eff: (L, out_dim)        f32, lr_mul * sqrt(2) folded in.
    """
    L, out_dim, in_dim = weights.shape
    w_scale = (1.0 / math.sqrt(in_dim)) * lr_mul
    w_eff = (jnp.transpose(weights, (0, 2, 1)).astype(jnp.float32)
             * (w_scale * ACT_SCALE)).astype(jnp.bfloat16)
    b_eff = biases.astype(jnp.float32) * (lr_mul * ACT_SCALE)
    return w_eff, b_eff


# ---------------------------------------------------------------------------
# Forward
# ---------------------------------------------------------------------------
def mapping_network_forward(styles, w_eff, b_eff, *, tm=1024,
                            compute_dtype=None, single_buffer_consts=True):
    """
    styles: (n_styles, batch, style_dim) float32
    w_eff / b_eff: pre-folded params from prepare_mapping_params().
    returns: (n_styles, batch, style_dim) == torch.stack([net(s) for s in styles])
    """
    n_styles, batch, dim = styles.shape
    L = w_eff.shape[0]
    assert w_eff.shape == (L, dim, dim), w_eff.shape
    assert b_eff.shape == (L, dim), b_eff.shape

    if compute_dtype is None:
        compute_dtype = _default_compute_dtype()

    x = styles.reshape(n_styles * batch, dim).astype(jnp.float32)
    n_rows = x.shape[0]

    # Row tile: as large as requested, but never larger than half the (8-padded)
    # row count so the "parallel" grid axis has >= 2 steps (v7x megacore) when
    # there is enough work.
    half_rows = _round_up(-(-n_rows // 2), 8)
    tm = max(8, min(tm, half_rows))
    total = _round_up(n_rows, tm)
    if total != n_rows:
        x = jnp.pad(x, ((0, total - n_rows), (0, 0)))
    grid = total // tm

    # Grid-invariant weight/bias specs; single-buffer them when supported.
    use_buffered1 = single_buffer_consts and _single_buffer_spec_supported()
    if use_buffered1:
        w_spec = pl.BlockSpec((L, dim, dim), lambda i: (0, 0, 0),
                              pipeline_mode=pl.Buffered(1))
        b_spec = pl.BlockSpec((L, dim), lambda i: (0, 0),
                              pipeline_mode=pl.Buffered(1))
    else:
        w_spec = pl.BlockSpec((L, dim, dim), lambda i: (0, 0, 0))
        b_spec = pl.BlockSpec((L, dim), lambda i: (0, 0))

    # VMEM budget: x/out tiles (double-buffered) + resident params + headroom for
    # in-kernel temporaries. Never lower than 32 MiB (>= every chip's default),
    # capped at 48 MiB (safe within v7x's 64 MiB physical VMEM).
    tile_bytes = tm * dim * 4
    w_bytes = L * dim * dim * 2
    b_bytes = L * dim * 4
    vmem_need = 4 * tile_bytes + (1 if use_buffered1 else 2) * (w_bytes + b_bytes)
    vmem_need += 4 * tile_bytes
    vmem_limit = int(min(max(vmem_need, 32 << 20), 48 << 20))

    kernel = functools.partial(_mapping_kernel, n_layers=L,
                               compute_dtype=compute_dtype)

    cost = pl.CostEstimate(
        flops=2 * total * L * dim * dim,
        transcendentals=total,
        bytes_accessed=total * dim * 4 * 2 + w_bytes + b_bytes,
    )

    out = pl.pallas_call(
        kernel,
        out_shape=jax.ShapeDtypeStruct((total, dim), styles.dtype),
        grid_spec=pltpu.PrefetchScalarGridSpec(
            num_scalar_prefetch=0,
            grid=(grid,),
            in_specs=[
                pl.BlockSpec((tm, dim), lambda i: (i, 0)),  # x row tile
                w_spec,                                     # weights (invariant)
                b_spec,                                     # biases  (invariant)
            ],
            out_specs=pl.BlockSpec((tm, dim), lambda i: (i, 0)),
        ),
        compiler_params=pltpu.CompilerParams(
            dimension_semantics=("parallel",),
            vmem_limit_bytes=vmem_limit),
        cost_estimate=cost,
    )(x, w_eff, b_eff)

    out = out[:n_rows]
    return out.reshape(n_styles, batch, dim)


# ---------------------------------------------------------------------------
# Pure-JAX f32 reference + init (for validation)
# ---------------------------------------------------------------------------
def mapping_network_reference(styles, weights, biases, *, lr_mul=0.01):
    n_styles, batch, dim = styles.shape
    x = styles.reshape(-1, dim).astype(jnp.float32)
    x = x * jax.lax.rsqrt(jnp.mean(x * x, axis=1, keepdims=True) + 1e-8)
    scale = (1.0 / math.sqrt(dim)) * lr_mul
    for l in range(weights.shape[0]):
        y = x @ (weights[l] * scale).T + biases[l] * lr_mul
        x = jnp.where(y >= 0.0, y, NEG_SLOPE * y) * ACT_SCALE
    return x.reshape(n_styles, batch, dim)


def init_mapping_params(key, style_dim, n_mlp=7, lr_mul=0.01):
    """Mirror EqualLinear.__init__: weight = randn(out, in) / lr_mul ; bias = zeros.
       Total layers = n_mlp + 1 (last one has v=False)."""
    n_layers = n_mlp + 1
    keys = jax.random.split(key, n_layers)
    ws = [jax.random.normal(k, (style_dim, style_dim), jnp.float32) / lr_mul
          for k in keys]
    weights = jnp.stack(ws)                           # (L, out, in) -- PyTorch layout
    biases = jnp.zeros((n_layers, style_dim), jnp.float32)
    return weights, biases


if __name__ == "__main__":
    style_dim = 128
    n_mlp = 7
    lr_mul = 0.01

    key = jax.random.PRNGKey(0)
    k_w, k_x1, k_x2 = jax.random.split(key, 3)

    weights, biases = init_mapping_params(k_w, style_dim, n_mlp=n_mlp, lr_mul=lr_mul)
    # Fold scales ONCE (hoisted out of the per-call path).
    w_eff, b_eff = prepare_mapping_params(weights, biases, lr_mul=lr_mul)

    def check(styles):
        out = mapping_network_forward(styles, w_eff, b_eff, lr_mul and None or None) \
            if False else mapping_network_forward(styles, w_eff, b_eff)
        out = jax.block_until_ready(out)
        assert out.shape == styles.shape, (out.shape, styles.shape)
        assert bool(jnp.all(jnp.isfinite(out)))
        ref = mapping_network_reference(styles, weights, biases, lr_mul=lr_mul)
        rel_err = float(jnp.max(jnp.abs(out - ref)) / (jnp.max(jnp.abs(ref)) + 1e-6))
        assert rel_err < 0.08, f"relative error too large: {rel_err}"
        return out

    # Small canonical case (single grid step).
    styles_small = jax.random.normal(k_x1, (2, 4, style_dim), jnp.float32)
    check(styles_small)

    # Slightly larger case: exercises row padding and a multi-step "parallel" grid.
    styles_big = jax.random.normal(k_x2, (2, 132, style_dim), jnp.float32)
    check(styles_big)

    print("KERNEL_OK")
</pallas_src>

<mosaic_0001>
module attributes {stable_mosaic.version = 11 : i64} {
  func.func @probe_kernel(%arg0: i32, %arg1: memref<8x128xf32, #tpu.memory_space<vmem>>, %arg2: memref<8x128xf32, #tpu.memory_space<vmem>>, %arg3: memref<8x128xf32, #tpu.memory_space<vmem>>) attributes {dimension_semantics = [#tpu.dimension_semantics<arbitrary>], iteration_bounds = array<i64: 2>, scalar_prefetch = 0 : i64, scratch_operands = 0 : i64, tpu.core_type = #tpu.core_type<tc>, window_params = [{transform_indices = @transform_0, window_bounds = array<i64: 8, 128>}, {pipeline_mode = #tpu.pipeline_mode<synchronous>, transform_indices = @transform_1, window_bounds = array<i64: 8, 128>}, {transform_indices = @transform_2, window_bounds = array<i64: 8, 128>}]} {
    %c0 = arith.constant 0 : index
    %c0_0 = arith.constant 0 : index
    %0 = vector.load %arg1[%c0, %c0_0] : memref<8x128xf32, #tpu.memory_space<vmem>>, vector<8x128xf32>
    %c0_1 = arith.constant 0 : index
    %c0_2 = arith.constant 0 : index
    %1 = vector.load %arg2[%c0_1, %c0_2] : memref<8x128xf32, #tpu.memory_space<vmem>>, vector<8x128xf32>
    %2 = arith.addf %0, %1 : vector<8x128xf32>
    %c0_3 = arith.constant 0 : index
    %c0_4 = arith.constant 0 : index
    %3 = vector.load %arg3[%c0_3, %c0_4] : memref<8x128xf32, #tpu.memory_space<vmem>>, vector<8x128xf32>
    tpu.vector_store %arg3[%c0_3, %c0_4], %2 {strides = array<i32>} : memref<8x128xf32, #tpu.memory_space<vmem>>, vector<8x128xf32>,
    return
  }
  func.func @transform_0(%arg0: i32) -> (i32, i32) {
    %c0_i32 = arith.constant 0 : i32
    %c0_i32_0 = arith.constant 0 : i32
    return %arg0, %c0_i32 : i32, i32
  }
  func.func @transform_1(%arg0: i32) -> (i32, i32) {
    %c0_i32 = arith.constant 0 : i32
    %c0_i32_0 = arith.constant 0 : i32
    %c0_i32_1 = arith.constant 0 : i32
    return %c0_i32, %c0_i32_0 : i32, i32
  }
  func.func @transform_2(%arg0: i32) -> (i32, i32) {
    %c0_i32 = arith.constant 0 : i32
    %c0_i32_0 = arith.constant 0 : i32
    return %arg0, %c0_i32 : i32, i32
  }
}

module attributes {stable_mosaic.version = 11 : i64} {
  func.func @_mapping_kernel(%arg0: i32, %arg1: memref<8x128xf32, #tpu.memory_space<vmem>>, %arg2: memref<8x128x128xbf16, #tpu.memory_space<vmem>>, %arg3: memref<8x128xf32, #tpu.memory_space<vmem>>, %arg4: memref<8x128xf32, #tpu.memory_space<vmem>>) attributes {dimension_semantics = [#tpu.dimension_semantics<parallel>], iteration_bounds = array<i64: 1>, scalar_prefetch = 0 : i64, scratch_operands = 0 : i64, tpu.core_type = #tpu.core_type<tc>, window_params = [{transform_indices = @transform_0, window_bounds = array<i64: 8, 128>}, {pipeline_mode = #tpu.pipeline_mode<synchronous>, transform_indices = @transform_1, window_bounds = array<i64: 8, 128, 128>}, {pipeline_mode = #tpu.pipeline_mode<synchronous>, transform_indices = @transform_2, window_bounds = array<i64: 8, 128>}, {transform_indices = @transform_3, window_bounds = array<i64: 8, 128>}]} {
    %c0 = arith.constant 0 : index
    %c0_0 = arith.constant 0 : index
    %0 = vector.load %arg1[%c0, %c0_0] : memref<8x128xf32, #tpu.memory_space<vmem>>, vector<8x128xf32>
    %1 = arith.mulf %0, %0 : vector<8x128xf32>
    %cst = arith.constant dense<0.000000e+00> : vector<8xf32>
    %2 = vector.multi_reduction <add>, %1, %cst [1] : vector<8x128xf32> to vector<8xf32>
    %3 = vector.shape_cast %2 : vector<8xf32> to vector<8x1xf32>
    %cst_1 = arith.constant 1.280000e+02 : f32
    %4 = vector.broadcast %cst_1 : f32 to vector<8x1xf32>
    %5 = arith.divf %3, %4 : vector<8x1xf32>
    %cst_2 = arith.constant 9.99999993E-9 : f32
    %6 = vector.broadcast %cst_2 : f32 to vector<8x1xf32>
    %7 = arith.addf %5, %6 : vector<8x1xf32>
    %8 = math.rsqrt %7 : vector<8x1xf32>
    %9 = vector.broadcast %8 : vector<8x1xf32> to vector<8x128xf32>
    %10 = arith.mulf %0, %9 : vector<8x128xf32>
    %11 = arith.truncf %10 : vector<8x128xf32> to vector<8x128xbf16>
    %c0_3 = arith.constant 0 : index
    %c0_4 = arith.constant 0 : index
    %c0_5 = arith.constant 0 : index
    %12 = vector.load %arg2[%c0_3, %c0_4, %c0_5] : memref<8x128x128xbf16, #tpu.memory_space<vmem>>, vector<1x128x128xbf16>
    %13 = vector.shape_cast %12 : vector<1x128x128xbf16> to vector<128x128xbf16>
    %cst_6 = arith.constant dense<0.000000e+00> : vector<8x128xf32>
    %14 = tpu.matmul %11, %13, %cst_6 {dimension_numbers = #tpu.dot_dimension_numbers<[1], [0], [0], [1], [0, 0, 1, 1], [], []>} : vector<8x128xbf16>, vector<128x128xbf16>, vector<8x128xf32> -> vector<8x128xf32>
    %c0_7 = arith.constant 0 : index
    %c0_8 = arith.constant 0 : index
    %15 = vector.load %arg3[%c0_7, %c0_8] : memref<8x128xf32, #tpu.memory_space<vmem>>, vector<1x128xf32>
    %16 = vector.shape_cast %15 : vector<1x128xf32> to vector<128xf32>
    %17 = vector.shape_cast %16 : vector<128xf32> to vector<1x128xf32>
    %18 = vector.broadcast %17 : vector<1x128xf32> to vector<8x128xf32>
    %19 = arith.addf %14, %18 : vector<8x128xf32>
    %cst_9 = arith.constant 0.000000e+00 : f32
    %20 = vector.broadcast %cst_9 : f32 to vector<8x128xf32>
    %21 = arith.cmpf oge, %19, %20 : vector<8x128xf32>
    %cst_10 = arith.constant 2.000000e-01 : f32
    %22 = vector.broadcast %cst_10 : f32 to vector<8x128xf32>
    %23 = arith.mulf %22, %19 : vector<8x128xf32>
    %24 = arith.select %21, %19, %23 : vector<8x128xi1>, vector<8x128xf32>
    %25 = arith.truncf %24 : vector<8x128xf32> to vector<8x128xbf16>
    %c1 = arith.constant 1 : index
    %c0_11 = arith.constant 0 : index
    %c0_12 = arith.constant 0 : index
    %26 = vector.load %arg2[%c1, %c0_11, %c0_12] : memref<8x128x128xbf16, #tpu.memory_space<vmem>>, vector<1x128x128xbf16>
    %27 = vector.shape_cast %26 : vector<1x128x128xbf16> to vector<128x128xbf16>
    %cst_13 = arith.constant dense<0.000000e+00> : vector<8x128xf32>
    %28 = tpu.matmul %25, %27, %cst_13 {dimension_numbers = #tpu.dot_dimension_numbers<[1], [0], [0], [1], [0, 0, 1, 1], [], []>} : vector<8x128xbf16>, vector<128x128xbf16>, vector<8x128xf32> -> vector<8x128xf32>
    %c1_14 = arith.constant 1 : index
    %c0_15 = arith.constant 0 : index
    %29 = vector.load %arg3[%c1_14, %c0_15] : memref<8x128xf32, #tpu.memory_space<vmem>>, vector<1x128xf32>
    %30 = vector.shape_cast %29 : vector<1x128xf32> to vector<128xf32>
    %31 = vector.shape_cast %30 : vector<128xf32> to vector<1x128xf32>
    %32 = vector.broadcast %31 : vector<1x128xf32> to vector<8x128xf32>
    %33 = arith.addf %28, %32 : vector<8x128xf32>
    %cst_16 = arith.constant 0.000000e+00 : f32
    %34 = vector.broadcast %cst_16 : f32 to vector<8x128xf32>
    %35 = arith.cmpf oge, %33, %34 : vector<8x128xf32>
    %cst_17 = arith.constant 2.000000e-01 : f32
    %36 = vector.broadcast %cst_17 : f32 to vector<8x128xf32>
    %37 = arith.mulf %36, %33 : vector<8x128xf32>
    %38 = arith.select %35, %33, %37 : vector<8x128xi1>, vector<8x128xf32>
    %39 = arith.truncf %38 : vector<8x128xf32> to vector<8x128xbf16>
    %c2 = arith.constant 2 : index
    %c0_18 = arith.constant 0 : index
    %c0_19 = arith.constant 0 : index
    %40 = vector.load %arg2[%c2, %c0_18, %c0_19] : memref<8x128x128xbf16, #tpu.memory_space<vmem>>, vector<1x128x128xbf16>
    %41 = vector.shape_cast %40 : vector<1x128x128xbf16> to vector<128x128xbf16>
    %cst_20 = arith.constant dense<0.000000e+00> : vector<8x128xf32>
    %42 = tpu.matmul %39, %41, %cst_20 {dimension_numbers = #tpu.dot_dimension_numbers<[1], [0], [0], [1], [0, 0, 1, 1], [], []>} : vector<8x128xbf16>, vector<128x128xbf16>, vector<8x128xf32> -> vector<8x128xf32>
    %c2_21 = arith.constant 2 : index
    %c0_22 = arith.constant 0 : index
    %43 = vector.load %arg3[%c2_21, %c0_22] : memref<8x128xf32, #tpu.memory_space<vmem>>, vector<1x128xf32>
    %44 = vector.shape_cast %43 : vector<1x128xf32> to vector<128xf32>
    %45 = vector.shape_cast %44 : vector<128xf32> to vector<1x128xf32>
    %46 = vector.broadcast %45 : vector<1x128xf32> to vector<8x128xf32>
    %47 = arith.addf %42, %46 : vector<8x128xf32>
    %cst_23 = arith.constant 0.000000e+00 : f32
    %48 = vector.broadcast %cst_23 : f32 to vector<8x128xf32>
    %49 = arith.cmpf oge, %47, %48 : vector<8x128xf32>
    %cst_24 = arith.constant 2.000000e-01 : f32
    %50 = vector.broadcast %cst_24 : f32 to vector<8x128xf32>
    %51 = arith.mulf %50, %47 : vector<8x128xf32>
    %52 = arith.select %49, %47, %51 : vector<8x128xi1>, vector<8x128xf32>
    %53 = arith.truncf %52 : vector<8x128xf32> to vector<8x128xbf16>
    %c3 = arith.constant 3 : index
    %c0_25 = arith.constant 0 : index
    %c0_26 = arith.constant 0 : index
    %54 = vector.load %arg2[%c3, %c0_25, %c0_26] : memref<8x128x128xbf16, #tpu.memory_space<vmem>>, vector<1x128x128xbf16>
    %55 = vector.shape_cast %54 : vector<1x128x128xbf16> to vector<128x128xbf16>
    %cst_27 = arith.constant dense<0.000000e+00> : vector<8x128xf32>
    %56 = tpu.matmul %53, %55, %cst_27 {dimension_numbers = #tpu.dot_dimension_numbers<[1], [0], [0], [1], [0, 0, 1, 1], [], []>} : vector<8x128xbf16>, vector<128x128xbf16>, vector<8x128xf32> -> vector<8x128xf32>
    %c3_28 = arith.constant 3 : index
    %c0_29 = arith.constant 0 : index
    %57 = vector.load %arg3[%c3_28, %c0_29] : memref<8x128xf32, #tpu.memory_space<vmem>>, vector<1x128xf32>
    %58 = vector.shape_cast %57 : vector<1x128xf32> to vector<128xf32>
    %59 = vector.shape_cast %58 : vector<128xf32> to vector<1x128xf32>
    %60 = vector.broadcast %59 : vector<1x128xf32> to vector<8x128xf32>
    %61 = arith.addf %56, %60 : vector<8x128xf32>
    %cst_30 = arith.constant 0.000000e+00 : f32
    %62 = vector.broadcast %cst_30 : f32 to vector<8x128xf32>
    %63 = arith.cmpf oge, %61, %62 : vector<8x128xf32>
    %cst_31 = arith.constant 2.000000e-01 : f32
    %64 = vector.broadcast %cst_31 : f32 to vector<8x128xf32>
    %65 = arith.mulf %64, %61 : vector<8x128xf32>
    %66 = arith.select %63, %61, %65 : vector<8x128xi1>, vector<8x128xf32>
    %67 = arith.truncf %66 : vector<8x128xf32> to vector<8x128xbf16>
    %c4 = arith.constant 4 : index
    %c0_32 = arith.constant 0 : index
    %c0_33 = arith.constant 0 : index
    %68 = vector.load %arg2[%c4, %c0_32, %c0_33] : memref<8x128x128xbf16, #tpu.memory_space<vmem>>, vector<1x128x128xbf16>
    %69 = vector.shape_cast %68 : vector<1x128x128xbf16> to vector<128x128xbf16>
    %cst_34 = arith.constant dense<0.000000e+00> : vector<8x128xf32>
    %70 = tpu.matmul %67, %69, %cst_34 {dimension_numbers = #tpu.dot_dimension_numbers<[1], [0], [0], [1], [0, 0, 1, 1], [], []>} : vector<8x128xbf16>, vector<128x128xbf16>, vector<8x128xf32> -> vector<8x128xf32>
    %c4_35 = arith.constant 4 : index
    %c0_36 = arith.constant 0 : index
    %71 = vector.load %arg3[%c4_35, %c0_36] : memref<8x128xf32, #tpu.memory_space<vmem>>, vector<1x128xf32>
    %72 = vector.shape_cast %71 : vector<1x128xf32> to vector<128xf32>
    %73 = vector.shape_cast %72 : vector<128xf32> to vector<1x128xf32>
    %74 = vector.broadcast %73 : vector<1x128xf32> to vector<8x128xf32>
    %75 = arith.addf %70, %74 : vector<8x128xf32>
    %cst_37 = arith.constant 0.000000e+00 : f32
    %76 = vector.broadcast %cst_37 : f32 to vector<8x128xf32>
    %77 = arith.cmpf oge, %75, %76 : vector<8x128xf32>
    %cst_38 = arith.constant 2.000000e-01 : f32
    %78 = vector.broadcast %cst_38 : f32 to vector<8x128xf32>
    %79 = arith.mulf %78, %75 : vector<8x128xf32>
    %80 = arith.select %77, %75, %79 : vector<8x128xi1>, vector<8x128xf32>
    %81 = arith.truncf %80 : vector<8x128xf32> to vector<8x128xbf16>
    %c5 = arith.constant 5 : index
    %c0_39 = arith.constant 0 : index
    %c0_40 = arith.constant 0 : index
    %82 = vector.load %arg2[%c5, %c0_39, %c0_40] : memref<8x128x128xbf16, #tpu.memory_space<vmem>>, vector<1x128x128xbf16>
    %83 = vector.shape_cast %82 : vector<1x128x128xbf16> to vector<128x128xbf16>
    %cst_41 = arith.constant dense<0.000000e+00> : vector<8x128xf32>
    %84 = tpu.matmul %81, %83, %cst_41 {dimension_numbers = #tpu.dot_dimension_numbers<[1], [0], [0], [1], [0, 0, 1, 1], [], []>} : vector<8x128xbf16>, vector<128x128xbf16>, vector<8x128xf32> -> vector<8x128xf32>
    %c5_42 = arith.constant 5 : index
    %c0_43 = arith.constant 0 : index
    %85 = vector.load %arg3[%c5_42, %c0_43] : memref<8x128xf32, #tpu.memory_space<vmem>>, vector<1x128xf32>
    %86 = vector.shape_cast %85 : vector<1x128xf32> to vector<128xf32>
    %87 = vector.shape_cast %86 : vector<128xf32> to vector<1x128xf32>
    %88 = vector.broadcast %87 : vector<1x128xf32> to vector<8x128xf32>
    %89 = arith.addf %84, %88 : vector<8x128xf32>
    %cst_44 = arith.constant 0.000000e+00 : f32
    %90 = vector.broadcast %cst_44 : f32 to vector<8x128xf32>
    %91 = arith.cmpf oge, %89, %90 : vector<8x128xf32>
    %cst_45 = arith.constant 2.000000e-01 : f32
    %92 = vector.broadcast %cst_45 : f32 to vector<8x128xf32>
    %93 = arith.mulf %92, %89 : vector<8x128xf32>
    %94 = arith.select %91, %89, %93 : vector<8x128xi1>, vector<8x128xf32>
    %95 = arith.truncf %94 : vector<8x128xf32> to vector<8x128xbf16>
    %c6 = arith.constant 6 : index
    %c0_46 = arith.constant 0 : index
    %c0_47 = arith.constant 0 : index
    %96 = vector.load %arg2[%c6, %c0_46, %c0_47] : memref<8x128x128xbf16, #tpu.memory_space<vmem>>, vector<1x128x128xbf16>
    %97 = vector.shape_cast %96 : vector<1x128x128xbf16> to vector<128x128xbf16>
    %cst_48 = arith.constant dense<0.000000e+00> : vector<8x128xf32>
    %98 = tpu.matmul %95, %97, %cst_48 {dimension_numbers = #tpu.dot_dimension_numbers<[1], [0], [0], [1], [0, 0, 1, 1], [], []>} : vector<8x128xbf16>, vector<128x128xbf16>, vector<8x128xf32> -> vector<8x128xf32>
    %c6_49 = arith.constant 6 : index
    %c0_50 = arith.constant 0 : index
    %99 = vector.load %arg3[%c6_49, %c0_50] : memref<8x128xf32, #tpu.memory_space<vmem>>, vector<1x128xf32>
    %100 = vector.shape_cast %99 : vector<1x128xf32> to vector<128xf32>
    %101 = vector.shape_cast %100 : vector<128xf32> to vector<1x128xf32>
    %102 = vector.broadcast %101 : vector<1x128xf32> to vector<8x128xf32>
    %103 = arith.addf %98, %102 : vector<8x128xf32>
    %cst_51 = arith.constant 0.000000e+00 : f32
    %104 = vector.broadcast %cst_51 : f32 to vector<8x128xf32>
    %105 = arith.cmpf oge, %103, %104 : vector<8x128xf32>
    %cst_52 = arith.constant 2.000000e-01 : f32
    %106 = vector.broadcast %cst_52 : f32 to vector<8x128xf32>
    %107 = arith.mulf %106, %103 : vector<8x128xf32>
    %108 = arith.select %105, %103, %107 : vector<8x128xi1>, vector<8x128xf32>
    %109 = arith.truncf %108 : vector<8x128xf32> to vector<8x128xbf16>
    %c7 = arith.constant 7 : index
    %c0_53 = arith.constant 0 : index
    %c0_54 = arith.constant 0 : index
    %110 = vector.load %arg2[%c7, %c0_53, %c0_54] : memref<8x128x128xbf16, #tpu.memory_space<vmem>>, vector<1x128x128xbf16>
    %111 = vector.shape_cast %110 : vector<1x128x128xbf16> to vector<128x128xbf16>
    %cst_55 = arith.constant dense<0.000000e+00> : vector<8x128xf32>
    %112 = tpu.matmul %109, %111, %cst_55 {dimension_numbers = #tpu.dot_dimension_numbers<[1], [0], [0], [1], [0, 0, 1, 1], [], []>} : vector<8x128xbf16>, vector<128x128xbf16>, vector<8x128xf32> -> vector<8x128xf32>
    %c7_56 = arith.constant 7 : index
    %c0_57 = arith.constant 0 : index
    %113 = vector.load %arg3[%c7_56, %c0_57] : memref<8x128xf32, #tpu.memory_space<vmem>>, vector<1x128xf32>
    %114 = vector.shape_cast %113 : vector<1x128xf32> to vector<128xf32>
    %115 = vector.shape_cast %114 : vector<128xf32> to vector<1x128xf32>
    %116 = vector.broadcast %115 : vector<1x128xf32> to vector<8x128xf32>
    %117 = arith.addf %112, %116 : vector<8x128xf32>
    %cst_58 = arith.constant 0.000000e+00 : f32
    %118 = vector.broadcast %cst_58 : f32 to vector<8x128xf32>
    %119 = arith.cmpf oge, %117, %118 : vector<8x128xf32>
    %cst_59 = arith.constant 2.000000e-01 : f32
    %120 = vector.broadcast %cst_59 : f32 to vector<8x128xf32>
    %121 = arith.mulf %120, %117 : vector<8x128xf32>
    %122 = arith.select %119, %117, %121 : vector<8x128xi1>, vector<8x128xf32>
    %c0_60 = arith.constant 0 : index
    %c0_61 = arith.constant 0 : index
    %123 = vector.load %arg4[%c0_60, %c0_61] : memref<8x128xf32, #tpu.memory_space<vmem>>, vector<8x128xf32>
    tpu.vector_store %arg4[%c0_60, %c0_61], %122 {strides = array<i32>} : memref<8x128xf32, #tpu.memory_space<vmem>>, vector<8x128xf32>,
    return
  }
  func.func @transform_0(%arg0: i32) -> (i32, i32) {
    %c0_i32 = arith.constant 0 : i32
    %c0_i32_0 = arith.constant 0 : i32
    return %arg0, %c0_i32 : i32, i32
  }
  func.func @transform_1(%arg0: i32) -> (i32, i32, i32) {
    %c0_i32 = arith.constant 0 : i32
    %c0_i32_0 = arith.constant 0 : i32
    %c0_i32_1 = arith.constant 0 : i32
    %c0_i32_2 = arith.constant 0 : i32
    return %c0_i32, %c0_i32_0, %c0_i32_1 : i32, i32, i32
  }
  func.func @transform_2(%arg0: i32) -> (i32, i32) {
    %c0_i32 = arith.constant 0 : i32
    %c0_i32_0 = arith.constant 0 : i32
    %c0_i32_1 = arith.constant 0 : i32
    return %c0_i32, %c0_i32_0 : i32, i32
  }
  func.func @transform_3(%arg0: i32) -> (i32, i32) {
    %c0_i32 = arith.constant 0 : i32
    %c0_i32_0 = arith.constant 0 : i32
    return %arg0, %c0_i32 : i32, i32
  }
}

</mosaic_0001>

<llo_original>
// kernel: tpu_custom_call.1
$region0: #{tpu_custom_call.1}
  #allocation0 [shape = 'u32[]', space=smem, size = 0x4, offset = 0x4, fixed_abs, tag = 'smem constant byte address 0x4 - core index']
  #allocation1 [shape = 'u32[72,128]{1,0:T(1,128)}', space=vmem, size = 0x9000, scoped, tag = 'internal scratch']
  %s0 = inlined_call_operand.hbm [shape: f32[16,128], index: 0, kind: input, shape index: {}]
  %s1 = inlined_call_operand.hbm [shape: f32[8,128], index: 1, kind: input, shape index: {}]
  %s2 = inlined_call_operand.hbm [shape: f32[16,128], index: 2, kind: output, shape index: {}]
  %s3 = sld [smem:[#allocation0]]
  $region49: #{tpu_custom_call.1} parent=0
    _
  %s5 = ssub.s32 1, %s3
  %s6 = scalar_select 0, %s5, %s3
  $region1: #{tpu_custom_call.1} parent=0
    #allocation2 [shape = 'u8[8192]{0}', space=vmem, size = 0x2000, scoped, tag = 'input window, operand 0']
    #allocation3 [shape = 's32[2]{0}', space=sflag, size = 0x8, scoped, tag = 'scoped memory for tpu_custom_call.1']
    #allocation4 [shape = 's32[2]{0}', space=sflag, size = 0x8, scoped, tag = 'scoped memory for tpu_custom_call.1']
    #allocation5 [shape = 'u8[4096]{0}', space=vmem, size = 0x1000, scoped, tag = 'input window, operand 1, single buffered']
    #allocation6 [shape = 's32[1]{0}', space=sflag, size = 0x4, scoped, tag = 'scoped memory for tpu_custom_call.1']
    #allocation7 [shape = 'u8[8192]{0}', space=vmem, size = 0x2000, scoped, tag = 'output window, operand 0']
    %7 = vsyncpa [#allocation3], 0
    %s8 = scalar_lea.sflag [#allocation3], 1
    %9 = vsyncpa %s8, 0
    %10 = vsyncpa [#allocation6], 0
    %11 = vsyncpa [#allocation4], 0
    %s12 = scalar_lea.sflag [#allocation4], 1
    %13 = vsyncpa %s12, 0
    loop: start=0, step=1, limit=4
    $region2: #{tpu_custom_call.1} parent=1 // loop_pre_header
      _
    $region3: #{tpu_custom_call.1} parent=1 // loop_header
      %s15 = sphi 0, %s19
      %p16 = scmp.ge.s32.totalorder %s15, 4
      %s25 = sphi 0, %s27
      %s28 = sphi 0, %s25
      %s29 = sphi 0, %s28
      %s45 = sphi 0, %s29
      %s49 = sphi 0, %s49
      %s51 = sphi 0, %s49
      %s52 = sphi 0, %s51
      %s66 = sphi 0, %s52
      %s72 = sphi 0, %s74
      %s75 = sphi 0, %s72
      %s76 = sphi 0, %s75
      %s92 = sphi 0, %s76
    $region4: #{tpu_custom_call.1} parent=1 // loop_header_branch
      %18 = sbr.rel (%p16) target = $region8
    $region5: #{tpu_custom_call.1} parent=1 // loop_body
      %s20 = ssub.s32 %s15, 1
      %s21 = ssub.s32 %s15, 2
      %s22 = sadd.s32 %s15, 1
      %s23 = ssub.s32 %s15, %s22
      %p24 = scmp.eq.s32.totalorder %s23, 0
      %s26 = sadd.s32 %s25, 1
      %s27 = scalar_select %p24, %s25, %s26
      %p30 = pneg %p24
      %p31 = scmp.eq.s32.totalorder %s15, 1
      %p32 = por %p30, %p31
      %p33 = scmp.ne.s32.totalorder %s25, %s28
      %p34 = scmp.eq.s32.totalorder %s15, 0
      %p35 = por %p33, %p34
      %p36 = scmp.ne.s32.totalorder %s25, %s28
      %p37 = scmp.eq.s32.totalorder %s20, 1
      %p38 = por %p36, %p37
      %p39 = scmp.ne.s32.totalorder %s28, %s29
      %p40 = scmp.eq.s32.totalorder %s20, 0
      %p41 = por %p39, %p40
      %p42 = scmp.ne.s32.totalorder %s28, %s29
      %p43 = scmp.eq.s32.totalorder %s21, 1
      %p44 = por %p42, %p43
      %p46 = scmp.ne.s32.totalorder %s29, %s45
      %p47 = scmp.eq.s32.totalorder %s21, 0
      %p48 = por %p46, %p47
      %s50 = sadd.s32 %s49, 1
      %p53 = scmp.eq.s32.totalorder %s15, 1
      %p54 = scmp.ne.s32.totalorder %s49, %s51
      %p55 = scmp.eq.s32.totalorder %s15, 0
      %p56 = por %p54, %p55
      %p57 = scmp.ne.s32.totalorder %s49, %s51
      %p58 = scmp.eq.s32.totalorder %s20, 1
      %p59 = por %p57, %p58
      %p60 = scmp.ne.s32.totalorder %s51, %s52
      %p61 = scmp.eq.s32.totalorder %s20, 0
      %p62 = por %p60, %p61
      %p63 = scmp.ne.s32.totalorder %s51, %s52
      %p64 = scmp.eq.s32.totalorder %s21, 1
      %p65 = por %p63, %p64
      %p67 = scmp.ne.s32.totalorder %s52, %s66
      %p68 = scmp.eq.s32.totalorder %s21, 0
      %p69 = por %p67, %p68
      %s70 = ssub.s32 %s15, %s22
      %p71 = scmp.eq.s32.totalorder %s70, 0
      %s73 = sadd.s32 %s72, 1
      %s74 = scalar_select %p71, %s72, %s73
      %p77 = pneg %p71
      %p78 = scmp.eq.s32.totalorder %s15, 1
      %p79 = por %p77, %p78
      %p80 = scmp.ne.s32.totalorder %s72, %s75
      %p81 = scmp.eq.s32.totalorder %s15, 0
      %p82 = por %p80, %p81
      %p83 = scmp.ne.s32.totalorder %s72, %s75
      %p84 = scmp.eq.s32.totalorder %s20, 1
      %p85 = por %p83, %p84
      %p86 = scmp.ne.s32.totalorder %s75, %s76
      %p87 = scmp.eq.s32.totalorder %s20, 0
      %p88 = por %p86, %p87
      %p89 = scmp.ne.s32.totalorder %s75, %s76
      %p90 = scmp.eq.s32.totalorder %s21, 1
      %p91 = por %p89, %p90
      %p93 = scmp.ne.s32.totalorder %s76, %s92
      %p94 = scmp.eq.s32.totalorder %s21, 0
      %p95 = por %p93, %p94
      %p96 = scmp.le.s32.totalorder 1, %s15
      %p97 = scmp.lt.s32.totalorder %s15, 3
      %p98 = pnand %p96, %p97
      %p99 = pneg %p98
      // Predicated region
      $region9: #{tpu_custom_call.1} parent=5 // pred_check
        _
      $region10: #{tpu_custom_call.1} parent=5 // pred_check_branch
        %101 = sbr.rel (%p98) target = $region12
      $region11: #{tpu_custom_call.1} parent=5 // pred_region
        %s102 = ssub.s32 %s15, 1
        // Predicated region
        $region13: #{tpu_custom_call.1} parent=11 // pred_check
          %p103 = pneg %p62
        $region14: #{tpu_custom_call.1} parent=11 // pred_check_branch
          %105 = sbr.rel (%p103) target = $region16
        $region15: #{tpu_custom_call.1} parent=11 // pred_region
          %107 = vsyncadd [#allocation6], 0
          %s109 = sshll.u32 %s1, 4
          %s110 = int_to_ptr.hbm [resolvable:$true] %s109
          %s111 = sshll.u32 [#allocation5], 4
          %s112 = int_to_ptr.vmem [resolvable:$true] %s111
          %114 = dma.hbm_to_vmem [thread:$0]  %s110, 128, %s112, [#allocation6]
        $region16: #{tpu_custom_call.1} parent=11 // pred_fallthru
          _
      $region12: #{tpu_custom_call.1} parent=5 // pred_fallthru
        _
      %p115 = scmp.lt.s32.totalorder %s15, 2
      // Predicated region
      $region17: #{tpu_custom_call.1} parent=5 // pred_check
        %p116 = pneg %p115
      $region18: #{tpu_custom_call.1} parent=5 // pred_check_branch
        %118 = sbr.rel (%p116) target = $region20
      $region19: #{tpu_custom_call.1} parent=5 // pred_region
        // Predicated region
        $region21: #{tpu_custom_call.1} parent=19 // pred_check
          %p119 = pneg %p35
        $region22: #{tpu_custom_call.1} parent=19 // pred_check_branch
          %121 = sbr.rel (%p119) target = $region24
        $region23: #{tpu_custom_call.1} parent=19 // pred_region
          %s122 = sand.u32 %s25, 1
          %s123 = scalar_lea.sflag [#allocation3], %s122
          %s124 = sand.u32 %s25, 1
          %s125 = smul.addr %s124, 8
          %s126 = scalar_lea.vmem [#allocation2], %s125
          %128 = vsyncadd %s123, 0
          %s129 = smul.addr %s15, 8
          %s130 = scalar_lea.hbm %s0, %s129
          %s132 = sshll.u32 %s130, 4
          %s133 = int_to_ptr.hbm [resolvable:$true] %s132
          %s134 = sshll.u32 %s126, 4
          %s135 = int_to_ptr.vmem [resolvable:$true] %s134
          %137 = dma.hbm_to_vmem [thread:$0]  %s133, 128, %s135, %s123
        $region24: #{tpu_custom_call.1} parent=19 // pred_fallthru
          _
      $region20: #{tpu_custom_call.1} parent=5 // pred_fallthru
        _
      %p138 = scmp.le.s32.totalorder 1, %s15
      %p139 = scmp.lt.s32.totalorder %s15, 3
      %p140 = pnand %p138, %p139
      %p141 = pneg %p140
      // Predicated region
      $region25: #{tpu_custom_call.1} parent=5 // pred_check
        _
      $region26: #{tpu_custom_call.1} parent=5 // pred_check_branch
        %143 = sbr.rel (%p140) target = $region28
      $region27: #{tpu_custom_call.1} parent=5 // pred_region
        %s144 = ssub.s32 %s15, 1
        %s145 = sand.u32 %s28, 1
        %s146 = scalar_lea.sflag [#allocation3], %s145
        %s147 = sand.u32 %s28, 1
        %s148 = smul.addr %s147, 8
        %s149 = scalar_lea.vmem [#allocation2], %s148
        // Predicated region
        $region29: #{tpu_custom_call.1} parent=27 // pred_check
          %p150 = pneg %p41
        $region30: #{tpu_custom_call.1} parent=27 // pred_check_branch
          %152 = sbr.rel (%p150) target = $region32
        $region31: #{tpu_custom_call.1} parent=27 // pred_region
          %154 = dma.done %s146, 128
        $region32: #{tpu_custom_call.1} parent=27 // pred_fallthru
          _
        // Predicated region
        $region33: #{tpu_custom_call.1} parent=27 // pred_check
          %p155 = pneg %p62
        $region34: #{tpu_custom_call.1} parent=27 // pred_check_branch
          %157 = sbr.rel (%p155) target = $region36
        $region35: #{tpu_custom_call.1} parent=27 // pred_region
          %159 = dma.done [#allocation6], 128
        $region36: #{tpu_custom_call.1} parent=27 // pred_fallthru
          _
        %s160 = sand.u32 %s28, 1
        %s161 = scalar_lea.sflag [#allocation3], %s160
        %s162 = sand.u32 %s28, 1
        %s163 = smul.addr %s162, 8
        %s164 = scalar_lea.vmem [#allocation2], %s163
        %p165 = pneg %p41
        %p166 = pneg %p38
        %p167 = pneg %p62
        %p168 = pneg %p59
        %p169 = pneg %p88
        %p170 = pneg %p85
        %s171 = sand.u32 %s75, 1
        %s172 = scalar_lea.sflag [#allocation4], %s171
        %s173 = sand.u32 %s75, 1
        %s174 = smul.addr %s173, 8
        %s175 = scalar_lea.vmem [#allocation7], %s174
        %v176 = vld [vmem:[%s149] sm:$0xff]
        %v177 = vld [vmem:[#allocation5] sm:$0xff]
        %v178 = vadd.f32 %v176, %v177
        %179 = vst [vmem:[%s175] sm:$0xff] %v178
        %s180 = sand.u32 %s75, 1
        %s181 = scalar_lea.sflag [#allocation4], %s180
        %s182 = sand.u32 %s75, 1
        %s183 = smul.addr %s182, 8
        %s184 = scalar_lea.vmem [#allocation7], %s183
        // Predicated region
        $region37: #{tpu_custom_call.1} parent=27 // pred_check
          %p185 = pneg %p85
        $region38: #{tpu_custom_call.1} parent=27 // pred_check_branch
          %187 = sbr.rel (%p185) target = $region40
        $region39: #{tpu_custom_call.1} parent=27 // pred_region
          %189 = vsyncadd %s181, 0
          %s190 = smul.addr %s20, 8
          %s191 = scalar_lea.hbm %s2, %s190
          %s193 = sshll.u32 %s184, 4
          %s194 = int_to_ptr.vmem [resolvable:$true] %s193
          %s195 = sshll.u32 %s191, 4
          %s196 = int_to_ptr.hbm [resolvable:$true] %s195
          %198 = dma.vmem_to_hbm [thread:$0]  %s194, 128, %s196, %s181
        $region40: #{tpu_custom_call.1} parent=27 // pred_fallthru
          _
      $region28: #{tpu_custom_call.1} parent=5 // pred_fallthru
        _
      %p199 = scmp.le.s32.totalorder 2, %s15
      // Predicated region
      $region41: #{tpu_custom_call.1} parent=5 // pred_check
        %p200 = pneg %p199
      $region42: #{tpu_custom_call.1} parent=5 // pred_check_branch
        %202 = sbr.rel (%p200) target = $region44
      $region43: #{tpu_custom_call.1} parent=5 // pred_region
        %s203 = ssub.s32 %s15, 2
        // Predicated region
        $region45: #{tpu_custom_call.1} parent=43 // pred_check
          %p204 = pneg %p91
        $region46: #{tpu_custom_call.1} parent=43 // pred_check_branch
          %206 = sbr.rel (%p204) target = $region48
        $region47: #{tpu_custom_call.1} parent=43 // pred_region
          %s207 = sand.u32 %s76, 1
          %s208 = scalar_lea.sflag [#allocation4], %s207
          %s209 = sand.u32 %s76, 1
          %s210 = smul.addr %s209, 8
          %s211 = scalar_lea.vmem [#allocation7], %s210
          %213 = dma.done %s208, 128
        $region48: #{tpu_custom_call.1} parent=43 // pred_fallthru
          _
      $region44: #{tpu_custom_call.1} parent=5 // pred_fallthru
        _
    $region6: #{tpu_custom_call.1} parent=1 // loop_footer
      %s19 = sadd.s32 1, %s15
    $region7: #{tpu_custom_call.1} parent=1 // loop_footer_branch
      %14 = sbr.rel target = $region3
    $region8: #{tpu_custom_call.1} parent=1 // loop_exit
      _
    %214 = vsyncpa [#allocation3], 1
    %s215 = scalar_lea.sflag [#allocation3], 1
    %216 = vsyncpa %s215, 1
    %217 = vsyncpa [#allocation6], 1
    %218 = vsyncpa [#allocation4], 1
    %s219 = scalar_lea.sflag [#allocation4], 1
    %220 = vsyncpa %s219, 1

// kernel: tpu_custom_call.1
$region0: #{tpu_custom_call.1}
  #allocation0 [shape = 'u32[]', space=smem, size = 0x4, offset = 0x4, fixed_abs, tag = 'smem constant byte address 0x4 - core index']
  #allocation1 [shape = 'u32[72,128]{1,0:T(1,128)}', space=vmem, size = 0x9000, scoped, tag = 'internal scratch']
  %s0 = inlined_call_operand.hbm [shape: f32[8,128], index: 0, kind: input, shape index: {}]
  %s1 = inlined_call_operand.hbm [shape: bf16[8,128,128], index: 1, kind: input, shape index: {}]
  %s2 = inlined_call_operand.hbm [shape: f32[8,128], index: 2, kind: input, shape index: {}]
  %s3 = inlined_call_operand.hbm [shape: f32[8,128], index: 3, kind: output, shape index: {}]
  %s4 = sld [smem:[#allocation0]]
  $region34: #{tpu_custom_call.1} parent=0
    _
  %s6 = ssub.s32 1, %s4
  %s7 = scalar_select 0, %s6, %s4
  $region1: #{tpu_custom_call.1} parent=0
    #allocation2 [shape = 'u8[4096]{0}', space=vmem, size = 0x1000, scoped, tag = 'input window, operand 0, single buffered']
    #allocation3 [shape = 's32[1]{0}', space=sflag, size = 0x4, scoped, tag = 'scoped memory for tpu_custom_call.1']
    #allocation4 [shape = 's32[1]{0}', space=sflag, size = 0x4, scoped, tag = 'scoped memory for tpu_custom_call.1']
    #allocation5 [shape = 'u8[262144]{0}', space=vmem, size = 0x40000, scoped, tag = 'input window, operand 1, single buffered']
    #allocation6 [shape = 's32[1]{0}', space=sflag, size = 0x4, scoped, tag = 'scoped memory for tpu_custom_call.1']
    #allocation7 [shape = 'u8[4096]{0}', space=vmem, size = 0x1000, scoped, tag = 'input window, operand 2, single buffered']
    #allocation8 [shape = 'u8[4096]{0}', space=vmem, size = 0x1000, scoped, tag = 'output window, operand 0, single buffered']
    %8 = vsyncpa [#allocation3], 0
    %9 = vsyncpa [#allocation6], 0
    %10 = vsyncpa [#allocation4], 0
    // Predicated region
    $region2: #{tpu_custom_call.1} parent=1 // pred_check
      _
    $region3: #{tpu_custom_call.1} parent=1 // pred_check_branch
      %12 = sbr.rel (0) target = $region5
    $region4: #{tpu_custom_call.1} parent=1 // pred_region
      %14 = vsyncadd [#allocation3], 0
      %s16 = sshll.u32 %s0, 4
      %s17 = int_to_ptr.hbm [resolvable:$true] %s16
      %s18 = sshll.u32 [#allocation2], 4
      %s19 = int_to_ptr.vmem [resolvable:$true] %s18
      %21 = dma.hbm_to_vmem [thread:$0]  %s17, 128, %s19, [#allocation3]
    $region5: #{tpu_custom_call.1} parent=1 // pred_fallthru
      _
    // Predicated region
    $region6: #{tpu_custom_call.1} parent=1 // pred_check
      _
    $region7: #{tpu_custom_call.1} parent=1 // pred_check_branch
      %23 = sbr.rel (0) target = $region9
    $region8: #{tpu_custom_call.1} parent=1 // pred_region
      %25 = vsyncadd [#allocation6], 0
      %s26 = sshll.u32 %s1, 4
      %s27 = int_to_ptr.hbm [resolvable:$true] %s26
      %s28 = sshll.u32 [#allocation5], 4
      %s29 = int_to_ptr.vmem [resolvable:$true] %s28
      %34 = dma.hbm_to_vmem [thread:$0]  %s27, 8192, %s29, [#allocation6], 64, 64, 4
    $region9: #{tpu_custom_call.1} parent=1 // pred_fallthru
      _
    // Predicated region
    $region10: #{tpu_custom_call.1} parent=1 // pred_check
      _
    $region11: #{tpu_custom_call.1} parent=1 // pred_check_branch
      %36 = sbr.rel (0) target = $region13
    $region12: #{tpu_custom_call.1} parent=1 // pred_region
      %38 = vsyncadd [#allocation6], 0
      %s40 = sshll.u32 %s2, 4
      %s41 = int_to_ptr.hbm [resolvable:$true] %s40
      %s42 = sshll.u32 [#allocation7], 4
      %s43 = int_to_ptr.vmem [resolvable:$true] %s42
      %45 = dma.hbm_to_vmem [thread:$0]  %s41, 128, %s43, [#allocation6]
    $region13: #{tpu_custom_call.1} parent=1 // pred_fallthru
      _
    // Predicated region
    $region14: #{tpu_custom_call.1} parent=1 // pred_check
      _
    $region15: #{tpu_custom_call.1} parent=1 // pred_check_branch
      %47 = sbr.rel (0) target = $region17
    $region16: #{tpu_custom_call.1} parent=1 // pred_region
      %49 = dma.done [#allocation3], 128
    $region17: #{tpu_custom_call.1} parent=1 // pred_fallthru
      _
    // Predicated region
    $region18: #{tpu_custom_call.1} parent=1 // pred_check
      _
    $region19: #{tpu_custom_call.1} parent=1 // pred_check_branch
      %51 = sbr.rel (0) target = $region21
    $region20: #{tpu_custom_call.1} parent=1 // pred_region
      %53 = dma.done [#allocation6], 8192
    $region21: #{tpu_custom_call.1} parent=1 // pred_fallthru
      _
    // Predicated region
    $region22: #{tpu_custom_call.1} parent=1 // pred_check
      _
    $region23: #{tpu_custom_call.1} parent=1 // pred_check_branch
      %55 = sbr.rel (0) target = $region25
    $region24: #{tpu_custom_call.1} parent=1 // pred_region
      %57 = dma.done [#allocation6], 128
    $region25: #{tpu_custom_call.1} parent=1 // pred_fallthru
      _
    %v58 = vld [vmem:[#allocation2] sm:$0xff]
    %v59 = vmul.f32 %v58, %v58
    %60 = vadd.xlane.f32.xlu0 %v59
    %v61 = vpop.xlane.xlu0 %60
    %v62 = vrcp.pop 128.0
    %v63 = vmul.f32 128.0, %v62
    %v64 = vsub.f32 1.0, %v63
    %v65 = vmul.f32 %v62, %v64
    %v66 = vadd.f32 %v62, %v65
    %vm67 = vweird.f32 %v62
    %v68 = vsel %vm67, %v62, %v66
    %v69 = vmul.f32 %v61, %v68
    %v70 = vadd.f32 %v69, 1e-08
    %v71 = vrsqrt.pop %v70
    %v72 = vmul.f32 %v71, %v70
    %v73 = vmul.f32 %v72, %v71
    %v74 = vmul.f32 0.5, %v73
    %v75 = vsub.f32 1.5, %v74
    %v76 = vmul.f32 %v71, %v75
    %vm77 = vweird.f32 %v70
    %vm78 = vweird.f32 %v71
    %vm79 = vmor %vm77, %vm78
    %v80 = vsel %vm79, %v71, %v76
    %v81 = vmul.f32 %v58, %v80
    %v82 = vpack.c.bf16 %v81, %v81
    %v83 = vld [vmem:[#allocation5] sm:$0xf]
    %v84 = vld [vmem:[#allocation5 + $0x4] sm:$0xf]
    %v85 = vld [vmem:[#allocation5 + $0x8] sm:$0xf]
    %v86 = vld [vmem:[#allocation5 + $0xc] sm:$0xf]
    %v87 = vld [vmem:[#allocation5 + $0x10] sm:$0xf]
    %v88 = vld [vmem:[#allocation5 + $0x14] sm:$0xf]
    %v89 = vld [vmem:[#allocation5 + $0x18] sm:$0xf]
    %v90 = vld [vmem:[#allocation5 + $0x1c] sm:$0xf]
    %v91 = vld [vmem:[#allocation5 + $0x20] sm:$0xf]
    %v92 = vld [vmem:[#allocation5 + $0x24] sm:$0xf]
    %v93 = vld [vmem:[#allocation5 + $0x28] sm:$0xf]
    %v94 = vld [vmem:[#allocation5 + $0x2c] sm:$0xf]
    %v95 = vld [vmem:[#allocation5 + $0x30] sm:$0xf]
    %v96 = vld [vmem:[#allocation5 + $0x34] sm:$0xf]
    %v97 = vld [vmem:[#allocation5 + $0x38] sm:$0xf]
    %v98 = vld [vmem:[#allocation5 + $0x3c] sm:$0xf]
    %v99 = vld [vmem:[#allocation7] sm:$0x1]
    %v100 = vperm.slane %v99, 0
    %v117 = vunpack.c.l.b16 %v83
    %v118 = vunpack.c.l.b16 %v84
    %v119 = vunpack.c.l.b16 %v85
    %v120 = vunpack.c.l.b16 %v86
    %v121 = vunpack.c.l.b16 %v87
    %v122 = vunpack.c.l.b16 %v88
    %v123 = vunpack.c.l.b16 %v89
    %v124 = vunpack.c.l.b16 %v90
    %v125 = vunpack.c.l.b16 %v91
    %v126 = vunpack.c.l.b16 %v92
    %v127 = vunpack.c.l.b16 %v93
    %v128 = vunpack.c.l.b16 %v94
    %v129 = vunpack.c.l.b16 %v95
    %v130 = vunpack.c.l.b16 %v96
    %v131 = vunpack.c.l.b16 %v97
    %v132 = vunpack.c.l.b16 %v98
    %v133 = vpack.c.b16 %v118, %v117
    %v134 = vpack.c.b16 %v120, %v119
    %v135 = vpack.c.b16 %v122, %v121
    %v136 = vpack.c.b16 %v124, %v123
    %v137 = vpack.c.b16 %v126, %v125
    %v138 = vpack.c.b16 %v128, %v127
    %v139 = vpack.c.b16 %v130, %v129
    %v140 = vpack.c.b16 %v132, %v131
    %149 = vmatpush.bf16.msra.mxu0 %v140
    %150 = vmatpush.bf16.msra.mxu0 %v139
    %151 = vmatpush.bf16.msra.mxu0 %v138
    %152 = vmatpush.bf16.msra.mxu0 %v137
    %153 = vmatpush.bf16.msra.mxu0 %v136
    %154 = vmatpush.bf16.msra.mxu0 %v135
    %155 = vmatpush.bf16.msra.mxu0 %v134
    %156 = vmatpush.bf16.msra.mxu0 %v133
    %157 = vmatmul.bf16.gmra.mxu0 %v82
    %v158 = vpop.f32.mrf.mxu0
    %v159 = vadd.f32 %v100, %v158
    %v160 = vpop.f32.mrf.mxu0
    %161 = vdwg.mxu0
    %vm162 = vcmp.ge.f32.partialorder %v159, 0.0
    %v163 = vmul.f32 %v159, 0.2
    %v164 = vsel %vm162, %v159, %v163
    %v165 = vpack.c.bf16 %v164, %v164
    %s166 = scalar_lea.vmem [#allocation5], 64
    %v167 = vld [vmem:[%s166] sm:$0xf]
    %v168 = vld [vmem:[%s166 + $0x4] sm:$0xf]
    %v169 = vld [vmem:[%s166 + $0x8] sm:$0xf]
    %v170 = vld [vmem:[%s166 + $0xc] sm:$0xf]
    %v171 = vld [vmem:[%s166 + $0x10] sm:$0xf]
    %v172 = vld [vmem:[%s166 + $0x14] sm:$0xf]
    %v173 = vld [vmem:[%s166 + $0x18] sm:$0xf]
    %v174 = vld [vmem:[%s166 + $0x1c] sm:$0xf]
    %v175 = vld [vmem:[%s166 + $0x20] sm:$0xf]
    %v176 = vld [vmem:[%s166 + $0x24] sm:$0xf]
    %v177 = vld [vmem:[%s166 + $0x28] sm:$0xf]
    %v178 = vld [vmem:[%s166 + $0x2c] sm:$0xf]
    %v179 = vld [vmem:[%s166 + $0x30] sm:$0xf]
    %v180 = vld [vmem:[%s166 + $0x34] sm:$0xf]
    %v181 = vld [vmem:[%s166 + $0x38] sm:$0xf]
    %v182 = vld [vmem:[%s166 + $0x3c] sm:$0xf]
    %v183 = vld [vmem:[#allocation7 + $0x1] sm:$0x1]
    %v184 = vperm.slane %v183, 0
    %v201 = vunpack.c.l.b16 %v167
    %v202 = vunpack.c.l.b16 %v168
    %v203 = vunpack.c.l.b16 %v169
    %v204 = vunpack.c.l.b16 %v170
    %v205 = vunpack.c.l.b16 %v171
    %v206 = vunpack.c.l.b16 %v172
    %v207 = vunpack.c.l.b16 %v173
    %v208 = vunpack.c.l.b16 %v174
    %v209 = vunpack.c.l.b16 %v175
    %v210 = vunpack.c.l.b16 %v176
    %v211 = vunpack.c.l.b16 %v177
    %v212 = vunpack.c.l.b16 %v178
    %v213 = vunpack.c.l.b16 %v179
    %v214 = vunpack.c.l.b16 %v180
    %v215 = vunpack.c.l.b16 %v181
    %v216 = vunpack.c.l.b16 %v182
    %v217 = vpack.c.b16 %v202, %v201
    %v218 = vpack.c.b16 %v204, %v203
    %v219 = vpack.c.b16 %v206, %v205
    %v220 = vpack.c.b16 %v208, %v207
    %v221 = vpack.c.b16 %v210, %v209
    %v222 = vpack.c.b16 %v212, %v211
    %v223 = vpack.c.b16 %v214, %v213
    %v224 = vpack.c.b16 %v216, %v215
    %233 = vmatpush.bf16.msra.mxu0 %v224
    %234 = vmatpush.bf16.msra.mxu0 %v223
    %235 = vmatpush.bf16.msra.mxu0 %v222
    %236 = vmatpush.bf16.msra.mxu0 %v221
    %237 = vmatpush.bf16.msra.mxu0 %v220
    %238 = vmatpush.bf16.msra.mxu0 %v219
    %239 = vmatpush.bf16.msra.mxu0 %v218
    %240 = vmatpush.bf16.msra.mxu0 %v217
    %241 = vmatmul.bf16.gmra.mxu0 %v165
    %v242 = vpop.f32.mrf.mxu0
    %v243 = vadd.f32 %v184, %v242
    %v244 = vpop.f32.mrf.mxu0
    %245 = vdwg.mxu0
    %vm246 = vcmp.ge.f32.partialorder %v243, 0.0
    %v247 = vmul.f32 %v243, 0.2
    %v248 = vsel %vm246, %v243, %v247
    %v249 = vpack.c.bf16 %v248, %v248
    %s250 = scalar_lea.vmem [#allocation5], 128
    %v251 = vld [vmem:[%s250] sm:$0xf]
    %v252 = vld [vmem:[%s250 + $0x4] sm:$0xf]
    %v253 = vld [vmem:[%s250 + $0x8] sm:$0xf]
    %v254 = vld [vmem:[%s250 + $0xc] sm:$0xf]
    %v255 = vld [vmem:[%s250 + $0x10] sm:$0xf]
    %v256 = vld [vmem:[%s250 + $0x14] sm:$0xf]
    %v257 = vld [vmem:[%s250 + $0x18] sm:$0xf]
    %v258 = vld [vmem:[%s250 + $0x1c] sm:$0xf]
    %v259 = vld [vmem:[%s250 + $0x20] sm:$0xf]
    %v260 = vld [vmem:[%s250 + $0x24] sm:$0xf]
    %v261 = vld [vmem:[%s250 + $0x28] sm:$0xf]
    %v262 = vld [vmem:[%s250 + $0x2c] sm:$0xf]
    %v263 = vld [vmem:[%s250 + $0x30] sm:$0xf]
    %v264 = vld [vmem:[%s250 + $0x34] sm:$0xf]
    %v265 = vld [vmem:[%s250 + $0x38] sm:$0xf]
    %v266 = vld [vmem:[%s250 + $0x3c] sm:$0xf]
    %v267 = vld [vmem:[#allocation7 + $0x2] sm:$0x1]
    %v268 = vperm.slane %v267, 0
    %v285 = vunpack.c.l.b16 %v251
    %v286 = vunpack.c.l.b16 %v252
    %v287 = vunpack.c.l.b16 %v253
    %v288 = vunpack.c.l.b16 %v254
    %v289 = vunpack.c.l.b16 %v255
    %v290 = vunpack.c.l.b16 %v256
    %v291 = vunpack.c.l.b16 %v257
    %v292 = vunpack.c.l.b16 %v258
    %v293 = vunpack.c.l.b16 %v259
    %v294 = vunpack.c.l.b16 %v260
    %v295 = vunpack.c.l.b16 %v261
    %v296 = vunpack.c.l.b16 %v262
    %v297 = vunpack.c.l.b16 %v263
    %v298 = vunpack.c.l.b16 %v264
    %v299 = vunpack.c.l.b16 %v265
    %v300 = vunpack.c.l.b16 %v266
    %v301 = vpack.c.b16 %v286, %v285
    %v302 = vpack.c.b16 %v288, %v287
    %v303 = vpack.c.b16 %v290, %v289
    %v304 = vpack.c.b16 %v292, %v291
    %v305 = vpack.c.b16 %v294, %v293
    %v306 = vpack.c.b16 %v296, %v295
    %v307 = vpack.c.b16 %v298, %v297
    %v308 = vpack.c.b16 %v300, %v299
    %317 = vmatpush.bf16.msra.mxu0 %v308
    %318 = vmatpush.bf16.msra.mxu0 %v307
    %319 = vmatpush.bf16.msra.mxu0 %v306
    %320 = vmatpush.bf16.msra.mxu0 %v305
    %321 = vmatpush.bf16.msra.mxu0 %v304
    %322 = vmatpush.bf16.msra.mxu0 %v303
    %323 = vmatpush.bf16.msra.mxu0 %v302
    %324 = vmatpush.bf16.msra.mxu0 %v301
    %325 = vmatmul.bf16.gmra.mxu0 %v249
    %v326 = vpop.f32.mrf.mxu0
    %v327 = vadd.f32 %v268, %v326
    %v328 = vpop.f32.mrf.mxu0
    %329 = vdwg.mxu0
    %vm330 = vcmp.ge.f32.partialorder %v327, 0.0
    %v331 = vmul.f32 %v327, 0.2
    %v332 = vsel %vm330, %v327, %v331
    %v333 = vpack.c.bf16 %v332, %v332
    %s334 = scalar_lea.vmem [#allocation5], 192
    %v335 = vld [vmem:[%s334] sm:$0xf]
    %v336 = vld [vmem:[%s334 + $0x4] sm:$0xf]
    %v337 = vld [vmem:[%s334 + $0x8] sm:$0xf]
    %v338 = vld [vmem:[%s334 + $0xc] sm:$0xf]
    %v339 = vld [vmem:[%s334 + $0x10] sm:$0xf]
    %v340 = vld [vmem:[%s334 + $0x14] sm:$0xf]
    %v341 = vld [vmem:[%s334 + $0x18] sm:$0xf]
    %v342 = vld [vmem:[%s334 + $0x1c] sm:$0xf]
    %v343 = vld [vmem:[%s334 + $0x20] sm:$0xf]
    %v344 = vld [vmem:[%s334 + $0x24] sm:$0xf]
    %v345 = vld [vmem:[%s334 + $0x28] sm:$0xf]
    %v346 = vld [vmem:[%s334 + $0x2c] sm:$0xf]
    %v347 = vld [vmem:[%s334 + $0x30] sm:$0xf]
    %v348 = vld [vmem:[%s334 + $0x34] sm:$0xf]
    %v349 = vld [vmem:[%s334 + $0x38] sm:$0xf]
    %v350 = vld [vmem:[%s334 + $0x3c] sm:$0xf]
    %v351 = vld [vmem:[#allocation7 + $0x3] sm:$0x1]
    %v352 = vperm.slane %v351, 0
    %v369 = vunpack.c.l.b16 %v335
    %v370 = vunpack.c.l.b16 %v336
    %v371 = vunpack.c.l.b16 %v337
    %v372 = vunpack.c.l.b16 %v338
    %v373 = vunpack.c.l.b16 %v339
    %v374 = vunpack.c.l.b16 %v340
    %v375 = vunpack.c.l.b16 %v341
    %v376 = vunpack.c.l.b16 %v342
    %v377 = vunpack.c.l.b16 %v343
    %v378 = vunpack.c.l.b16 %v344
    %v379 = vunpack.c.l.b16 %v345
    %v380 = vunpack.c.l.b16 %v346
    %v381 = vunpack.c.l.b16 %v347
    %v382 = vunpack.c.l.b16 %v348
    %v383 = vunpack.c.l.b16 %v349
    %v384 = vunpack.c.l.b16 %v350
    %v385 = vpack.c.b16 %v370, %v369
    %v386 = vpack.c.b16 %v372, %v371
    %v387 = vpack.c.b16 %v374, %v373
    %v388 = vpack.c.b16 %v376, %v375
    %v389 = vpack.c.b16 %v378, %v377
    %v390 = vpack.c.b16 %v380, %v379
    %v391 = vpack.c.b16 %v382, %v381
    %v392 = vpack.c.b16 %v384, %v383
    %401 = vmatpush.bf16.msra.mxu0 %v392
    %402 = vmatpush.bf16.msra.mxu0 %v391
    %403 = vmatpush.bf16.msra.mxu0 %v390
    %404 = vmatpush.bf16.msra.mxu0 %v389
    %405 = vmatpush.bf16.msra.mxu0 %v388
    %406 = vmatpush.bf16.msra.mxu0 %v387
    %407 = vmatpush.bf16.msra.mxu0 %v386
    %408 = vmatpush.bf16.msra.mxu0 %v385
    %409 = vmatmul.bf16.gmra.mxu0 %v333
    %v410 = vpop.f32.mrf.mxu0
    %v411 = vadd.f32 %v352, %v410
    %v412 = vpop.f32.mrf.mxu0
    %413 = vdwg.mxu0
    %vm414 = vcmp.ge.f32.partialorder %v411, 0.0
    %v415 = vmul.f32 %v411, 0.2
    %v416 = vsel %vm414, %v411, %v415
    %v417 = vpack.c.bf16 %v416, %v416
    %s418 = scalar_lea.vmem [#allocation5], 256
    %v419 = vld [vmem:[%s418] sm:$0xf]
    %v420 = vld [vmem:[%s418 + $0x4] sm:$0xf]
    %v421 = vld [vmem:[%s418 + $0x8] sm:$0xf]
    %v422 = vld [vmem:[%s418 + $0xc] sm:$0xf]
    %v423 = vld [vmem:[%s418 + $0x10] sm:$0xf]
    %v424 = vld [vmem:[%s418 + $0x14] sm:$0xf]
    %v425 = vld [vmem:[%s418 + $0x18] sm:$0xf]
    %v426 = vld [vmem:[%s418 + $0x1c] sm:$0xf]
    %v427 = vld [vmem:[%s418 + $0x20] sm:$0xf]
    %v428 = vld [vmem:[%s418 + $0x24] sm:$0xf]
    %v429 = vld [vmem:[%s418 + $0x28] sm:$0xf]
    %v430 = vld [vmem:[%s418 + $0x2c] sm:$0xf]
    %v431 = vld [vmem:[%s418 + $0x30] sm:$0xf]
    %v432 = vld [vmem:[%s418 + $0x34] sm:$0xf]
    %v433 = vld [vmem:[%s418 + $0x38] sm:$0xf]
    %v434 = vld [vmem:[%s418 + $0x3c] sm:$0xf]
    %v435 = vld [vmem:[#allocation7 + $0x4] sm:$0x1]
    %v436 = vperm.slane %v435, 0
    %v453 = vunpack.c.l.b16 %v419
    %v454 = vunpack.c.l.b16 %v420
    %v455 = vunpack.c.l.b16 %v421
    %v456 = vunpack.c.l.b16 %v422
    %v457 = vunpack.c.l.b16 %v423
    %v458 = vunpack.c.l.b16 %v424
    %v459 = vunpack.c.l.b16 %v425
    %v460 = vunpack.c.l.b16 %v426
    %v461 = vunpack.c.l.b16 %v427
    %v462 = vunpack.c.l.b16 %v428
    %v463 = vunpack.c.l.b16 %v429
    %v464 = vunpack.c.l.b16 %v430
    %v465 = vunpack.c.l.b16 %v431
    %v466 = vunpack.c.l.b16 %v432
    %v467 = vunpack.c.l.b16 %v433
    %v468 = vunpack.c.l.b16 %v434
    %v469 = vpack.c.b16 %v454, %v453
    %v470 = vpack.c.b16 %v456, %v455
    %v471 = vpack.c.b16 %v458, %v457
    %v472 = vpack.c.b16 %v460, %v459
    %v473 = vpack.c.b16 %v462, %v461
    %v474 = vpack.c.b16 %v464, %v463
    %v475 = vpack.c.b16 %v466, %v465
    %v476 = vpack.c.b16 %v468, %v467
    %485 = vmatpush.bf16.msra.mxu0 %v476
    %486 = vmatpush.bf16.msra.mxu0 %v475
    %487 = vmatpush.bf16.msra.mxu0 %v474
    %488 = vmatpush.bf16.msra.mxu0 %v473
    %489 = vmatpush.bf16.msra.mxu0 %v472
    %490 = vmatpush.bf16.msra.mxu0 %v471
    %491 = vmatpush.bf16.msra.mxu0 %v470
    %492 = vmatpush.bf16.msra.mxu0 %v469
    %493 = vmatmul.bf16.gmra.mxu0 %v417
    %v494 = vpop.f32.mrf.mxu0
    %v495 = vadd.f32 %v436, %v494
    %v496 = vpop.f32.mrf.mxu0
    %497 = vdwg.mxu0
    %vm498 = vcmp.ge.f32.partialorder %v495, 0.0
    %v499 = vmul.f32 %v495, 0.2
    %v500 = vsel %vm498, %v495, %v499
    %v501 = vpack.c.bf16 %v500, %v500
    %s502 = scalar_lea.vmem [#allocation5], 320
    %v503 = vld [vmem:[%s502] sm:$0xf]
    %v504 = vld [vmem:[%s502 + $0x4] sm:$0xf]
    %v505 = vld [vmem:[%s502 + $0x8] sm:$0xf]
    %v506 = vld [vmem:[%s502 + $0xc] sm:$0xf]
    %v507 = vld [vmem:[%s502 + $0x10] sm:$0xf]
    %v508 = vld [vmem:[%s502 + $0x14] sm:$0xf]
    %v509 = vld [vmem:[%s502 + $0x18] sm:$0xf]
    %v510 = vld [vmem:[%s502 + $0x1c] sm:$0xf]
    %v511 = vld [vmem:[%s502 + $0x20] sm:$0xf]
    %v512 = vld [vmem:[%s502 + $0x24] sm:$0xf]
    %v513 = vld [vmem:[%s502 + $0x28] sm:$0xf]
    %v514 = vld [vmem:[%s502 + $0x2c] sm:$0xf]
    %v515 = vld [vmem:[%s502 + $0x30] sm:$0xf]
    %v516 = vld [vmem:[%s502 + $0x34] sm:$0xf]
    %v517 = vld [vmem:[%s502 + $0x38] sm:$0xf]
    %v518 = vld [vmem:[%s502 + $0x3c] sm:$0xf]
    %v519 = vld [vmem:[#allocation7 + $0x5] sm:$0x1]
    %v520 = vperm.slane %v519, 0
    %v537 = vunpack.c.l.b16 %v503
    %v538 = vunpack.c.l.b16 %v504
    %v539 = vunpack.c.l.b16 %v505
    %v540 = vunpack.c.l.b16 %v506
    %v541 = vunpack.c.l.b16 %v507
    %v542 = vunpack.c.l.b16 %v508
    %v543 = vunpack.c.l.b16 %v509
    %v544 = vunpack.c.l.b16 %v510
    %v545 = vunpack.c.l.b16 %v511
    %v546 = vunpack.c.l.b16 %v512
    %v547 = vunpack.c.l.b16 %v513
    %v548 = vunpack.c.l.b16 %v514
    %v549 = vunpack.c.l.b16 %v515
    %v550 = vunpack.c.l.b16 %v516
    %v551 = vunpack.c.l.b16 %v517
    %v552 = vunpack.c.l.b16 %v518
    %v553 = vpack.c.b16 %v538, %v537
    %v554 = vpack.c.b16 %v540, %v539
    %v555 = vpack.c.b16 %v542, %v541
    %v556 = vpack.c.b16 %v544, %v543
    %v557 = vpack.c.b16 %v546, %v545
    %v558 = vpack.c.b16 %v548, %v547
    %v559 = vpack.c.b16 %v550, %v549
    %v560 = vpack.c.b16 %v552, %v551
    %569 = vmatpush.bf16.msra.mxu0 %v560
    %570 = vmatpush.bf16.msra.mxu0 %v559
    %571 = vmatpush.bf16.msra.mxu0 %v558
    %572 = vmatpush.bf16.msra.mxu0 %v557
    %573 = vmatpush.bf16.msra.mxu0 %v556
    %574 = vmatpush.bf16.msra.mxu0 %v555
    %575 = vmatpush.bf16.msra.mxu0 %v554
    %576 = vmatpush.bf16.msra.mxu0 %v553
    %577 = vmatmul.bf16.gmra.mxu0 %v501
    %v578 = vpop.f32.mrf.mxu0
    %v579 = vadd.f32 %v520, %v578
    %v580 = vpop.f32.mrf.mxu0
    %581 = vdwg.mxu0
    %vm582 = vcmp.ge.f32.partialorder %v579, 0.0
    %v583 = vmul.f32 %v579, 0.2
    %v584 = vsel %vm582, %v579, %v583
    %v585 = vpack.c.bf16 %v584, %v584
    %s586 = scalar_lea.vmem [#allocation5], 384
    %v587 = vld [vmem:[%s586] sm:$0xf]
    %v588 = vld [vmem:[%s586 + $0x4] sm:$0xf]
    %v589 = vld [vmem:[%s586 + $0x8] sm:$0xf]
    %v590 = vld [vmem:[%s586 + $0xc] sm:$0xf]
    %v591 = vld [vmem:[%s586 + $0x10] sm:$0xf]
    %v592 = vld [vmem:[%s586 + $0x14] sm:$0xf]
    %v593 = vld [vmem:[%s586 + $0x18] sm:$0xf]
    %v594 = vld [vmem:[%s586 + $0x1c] sm:$0xf]
    %v595 = vld [vmem:[%s586 + $0x20] sm:$0xf]
    %v596 = vld [vmem:[%s586 + $0x24] sm:$0xf]
    %v597 = vld [vmem:[%s586 + $0x28] sm:$0xf]
    %v598 = vld [vmem:[%s586 + $0x2c] sm:$0xf]
    %v599 = vld [vmem:[%s586 + $0x30] sm:$0xf]
    %v600 = vld [vmem:[%s586 + $0x34] sm:$0xf]
    %v601 = vld [vmem:[%s586 + $0x38] sm:$0xf]
    %v602 = vld [vmem:[%s586 + $0x3c] sm:$0xf]
    %v603 = vld [vmem:[#allocation7 + $0x6] sm:$0x1]
    %v604 = vperm.slane %v603, 0
    %v621 = vunpack.c.l.b16 %v587
    %v622 = vunpack.c.l.b16 %v588
    %v623 = vunpack.c.l.b16 %v589
    %v624 = vunpack.c.l.b16 %v590
    %v625 = vunpack.c.l.b16 %v591
    %v626 = vunpack.c.l.b16 %v592
    %v627 = vunpack.c.l.b16 %v593
    %v628 = vunpack.c.l.b16 %v594
    %v629 = vunpack.c.l.b16 %v595
    %v630 = vunpack.c.l.b16 %v596
    %v631 = vunpack.c.l.b16 %v597
    %v632 = vunpack.c.l.b16 %v598
    %v633 = vunpack.c.l.b16 %v599
    %v634 = vunpack.c.l.b16 %v600
    %v635 = vunpack.c.l.b16 %v601
    %v636 = vunpack.c.l.b16 %v602
    %v637 = vpack.c.b16 %v622, %v621
    %v638 = vpack.c.b16 %v624, %v623
    %v639 = vpack.c.b16 %v626, %v625
    %v640 = vpack.c.b16 %v628, %v627
    %v641 = vpack.c.b16 %v630, %v629
    %v642 = vpack.c.b16 %v632, %v631
    %v643 = vpack.c.b16 %v634, %v633
    %v644 = vpack.c.b16 %v636, %v635
    %653 = vmatpush.bf16.msra.mxu0 %v644
    %654 = vmatpush.bf16.msra.mxu0 %v643
    %655 = vmatpush.bf16.msra.mxu0 %v642
    %656 = vmatpush.bf16.msra.mxu0 %v641
    %657 = vmatpush.bf16.msra.mxu0 %v640
    %658 = vmatpush.bf16.msra.mxu0 %v639
    %659 = vmatpush.bf16.msra.mxu0 %v638
    %660 = vmatpush.bf16.msra.mxu0 %v637
    %661 = vmatmul.bf16.gmra.mxu0 %v585
    %v662 = vpop.f32.mrf.mxu0
    %v663 = vadd.f32 %v604, %v662
    %v664 = vpop.f32.mrf.mxu0
    %665 = vdwg.mxu0
    %vm666 = vcmp.ge.f32.partialorder %v663, 0.0
    %v667 = vmul.f32 %v663, 0.2
    %v668 = vsel %vm666, %v663, %v667
    %v669 = vpack.c.bf16 %v668, %v668
    %s670 = scalar_lea.vmem [#allocation5], 448
    %v671 = vld [vmem:[%s670] sm:$0xf]
    %v672 = vld [vmem:[%s670 + $0x4] sm:$0xf]
    %v673 = vld [vmem:[%s670 + $0x8] sm:$0xf]
    %v674 = vld [vmem:[%s670 + $0xc] sm:$0xf]
    %v675 = vld [vmem:[%s670 + $0x10] sm:$0xf]
    %v676 = vld [vmem:[%s670 + $0x14] sm:$0xf]
    %v677 = vld [vmem:[%s670 + $0x18] sm:$0xf]
    %v678 = vld [vmem:[%s670 + $0x1c] sm:$0xf]
    %v679 = vld [vmem:[%s670 + $0x20] sm:$0xf]
    %v680 = vld [vmem:[%s670 + $0x24] sm:$0xf]
    %v681 = vld [vmem:[%s670 + $0x28] sm:$0xf]
    %v682 = vld [vmem:[%s670 + $0x2c] sm:$0xf]
    %v683 = vld [vmem:[%s670 + $0x30] sm:$0xf]
    %v684 = vld [vmem:[%s670 + $0x34] sm:$0xf]
    %v685 = vld [vmem:[%s670 + $0x38] sm:$0xf]
    %v686 = vld [vmem:[%s670 + $0x3c] sm:$0xf]
    %v687 = vld [vmem:[#allocation7 + $0x7] sm:$0x1]
    %v688 = vperm.slane %v687, 0
    %v705 = vunpack.c.l.b16 %v671
    %v706 = vunpack.c.l.b16 %v672
    %v707 = vunpack.c.l.b16 %v673
    %v708 = vunpack.c.l.b16 %v674
    %v709 = vunpack.c.l.b16 %v675
    %v710 = vunpack.c.l.b16 %v676
    %v711 = vunpack.c.l.b16 %v677
    %v712 = vunpack.c.l.b16 %v678
    %v713 = vunpack.c.l.b16 %v679
    %v714 = vunpack.c.l.b16 %v680
    %v715 = vunpack.c.l.b16 %v681
    %v716 = vunpack.c.l.b16 %v682
    %v717 = vunpack.c.l.b16 %v683
    %v718 = vunpack.c.l.b16 %v684
    %v719 = vunpack.c.l.b16 %v685
    %v720 = vunpack.c.l.b16 %v686
    %v721 = vpack.c.b16 %v706, %v705
    %v722 = vpack.c.b16 %v708, %v707
    %v723 = vpack.c.b16 %v710, %v709
    %v724 = vpack.c.b16 %v712, %v711
    %v725 = vpack.c.b16 %v714, %v713
    %v726 = vpack.c.b16 %v716, %v715
    %v727 = vpack.c.b16 %v718, %v717
    %v728 = vpack.c.b16 %v720, %v719
    %737 = vmatpush.bf16.msra.mxu0 %v728
    %738 = vmatpush.bf16.msra.mxu0 %v727
    %739 = vmatpush.bf16.msra.mxu0 %v726
    %740 = vmatpush.bf16.msra.mxu0 %v725
    %741 = vmatpush.bf16.msra.mxu0 %v724
    %742 = vmatpush.bf16.msra.mxu0 %v723
    %743 = vmatpush.bf16.msra.mxu0 %v722
    %744 = vmatpush.bf16.msra.mxu0 %v721
    %745 = vmatmul.bf16.gmra.mxu0 %v669
    %v746 = vpop.f32.mrf.mxu0
    %v747 = vadd.f32 %v688, %v746
    %v748 = vpop.f32.mrf.mxu0
    %749 = vdwg.mxu0
    %vm750 = vcmp.ge.f32.partialorder %v747, 0.0
    %v751 = vmul.f32 %v747, 0.2
    %v752 = vsel %vm750, %v747, %v751
    %753 = vst [vmem:[#allocation8] sm:$0xff] %v752
    // Predicated region
    $region26: #{tpu_custom_call.1} parent=1 // pred_check
      _
    $region27: #{tpu_custom_call.1} parent=1 // pred_check_branch
      %755 = sbr.rel (0) target = $region29
    $region28: #{tpu_custom_call.1} parent=1 // pred_region
      %757 = vsyncadd [#allocation4], 0
      %s759 = sshll.u32 [#allocation8], 4
      %s760 = int_to_ptr.vmem [resolvable:$true] %s759
      %s761 = sshll.u32 %s3, 4
      %s762 = int_to_ptr.hbm [resolvable:$true] %s761
      %764 = dma.vmem_to_hbm [thread:$0]  %s760, 128, %s762, [#allocation4]
    $region29: #{tpu_custom_call.1} parent=1 // pred_fallthru
      _
    // Predicated region
    $region30: #{tpu_custom_call.1} parent=1 // pred_check
      _
    $region31: #{tpu_custom_call.1} parent=1 // pred_check_branch
      %766 = sbr.rel (0) target = $region33
    $region32: #{tpu_custom_call.1} parent=1 // pred_region
      %768 = dma.done [#allocation4], 128
    $region33: #{tpu_custom_call.1} parent=1 // pred_fallthru
      _
    %769 = vsyncpa [#allocation3], 1
    %770 = vsyncpa [#allocation6], 1
    %771 = vsyncpa [#allocation4], 1

</llo_original>
